<compile_context>
chip_gen: v6e
topology: v6e:2x2x1
jax: 0.10.0
libtpu: 0.0.40
codegen_flags: <defaults>
</compile_context>

<pallas_src>
import functools

import jax
import jax.numpy as jnp
from jax.experimental import pallas as pl
from jax.experimental.pallas import tpu as pltpu

_LANE = 128
_SUBLANE = 8


def _round_up(v, m):
    return ((v + m - 1) // m) * m


def _vmem_limit_bytes():
    """Per-generation scoped-VMEM limit: ~100 MiB on v5e/v6e, ~50 MiB on v7x."""
    cap = 64 * 1024 * 1024
    try:
        info = pltpu.get_tpu_info()
        cap = int(getattr(info, "vmem_capacity_bytes", cap)) or cap
    except Exception:
        pass
    return min(100 * 1024 * 1024, int(cap * 0.78))


def _choose_tiles(batch, d_p, h_p, vmem_limit):
    """Pick (TM batch tile, TD decoder column tile) under a VMEM budget."""
    budget = int(vmem_limit * 0.6)  # headroom for compiler-internal scratch
    b8 = _round_up(max(batch, 1), _SUBLANE)
    tm_cands = [c for c in (512, 256, 128, 64, 32, 16, 8)
                if c <= b8 and b8 % c == 0]
    if not tm_cands:
        tm_cands = [_SUBLANE]
    td_cands = [c for c in (2048, 1024, 512, 256, 128) if d_p % c == 0]

    def usage(tm, td):
        return (2 * tm * d_p * 2        # x tile (bf16, double-buffered)
                + 2 * d_p * h_p * 2     # encoder weight (grid-invariant)
                + 2 * h_p * 4           # encoder bias
                + 2 * h_p * td * 2      # decoder weight tile (double-buffered)
                + 2 * td * 4            # decoder bias tile
                + 2 * tm * td * 4       # output tile (f32, double-buffered)
                + tm * h_p * 2)         # h scratch (bf16, single buffer)

    for tm in tm_cands:                 # prefer large batch tile first: the
        for td in td_cands:             # decoder weights are re-streamed per
            if usage(tm, td) <= budget:  # m-tile, so big TM cuts HBM traffic.
                return tm, td
    # TODO(synk): K-stream the encoder weight for models too large for VMEM.
    return tm_cands[-1], td_cands[-1]


def _fused_kernel(x_ref, we_ref, be_ref, wd_ref, bd_ref, out_ref, h_ref):
    """grid = (m batch tile, head, d column tile).

    Encoder runs once per m-tile (at head==0, d==0) into VMEM scratch h_ref;
    every step emits one lane-dense decoder column tile for one head.
    """
    head = pl.program_id(1)
    dblk = pl.program_id(2)

    @pl.when(jnp.logical_and(head == 0, dblk == 0))
    def _():
        acc = jnp.dot(x_ref[...], we_ref[...],
                      preferred_element_type=jnp.float32)
        # bias + tanh in f32, keep h in bf16 for the decoder MXU matmul
        h_ref[...] = jnp.tanh(acc + be_ref[...]).astype(h_ref.dtype)

    y = jnp.dot(h_ref[...], wd_ref[0],
                preferred_element_type=jnp.float32) + bd_ref[0]
    out_ref[...] = jnp.where(y > 0.0, y, jnp.float32(0.01) * y)[None]


def pack_params(w_enc, b_enc, w_dec, b_dec):
    """One-time packing: pad to MXU-friendly shapes, bf16 weights, f32 biases."""
    D, H = w_enc.shape
    n_heads = w_dec.shape[0]
    D_p = _round_up(D, _LANE)
    H_p = _round_up(H, _LANE)

    we_p = jnp.zeros((D_p, H_p), jnp.bfloat16).at[:D, :H].set(
        w_enc.astype(jnp.bfloat16))
    be_p = jnp.zeros((1, H_p), jnp.float32).at[0, :H].set(
        b_enc.astype(jnp.float32))
    wd_p = jnp.zeros((n_heads, H_p, D_p), jnp.bfloat16).at[:, :H, :D].set(
        w_dec.astype(jnp.bfloat16))
    bd_p = jnp.zeros((n_heads, 1, D_p), jnp.float32).at[:, 0, :D].set(
        b_dec.astype(jnp.float32))
    return we_p, be_p, wd_p, bd_p


@functools.partial(jax.jit, static_argnames=("n_heads",))
def dense_autoencoder_forward(x, we_p, be_p, wd_p, bd_p, *, n_heads):
    """x: (B, S, V) -> (n_heads, B, S, V) float32 (eval-mode forward)."""
    orig_shape = x.shape
    B = orig_shape[0]
    x_flat = x.reshape(B, -1).astype(jnp.float32)   # torch .view(B,-1).float()
    D = x_flat.shape[1]

    D_p, H_p = we_p.shape
    assert wd_p.shape == (n_heads, H_p, D_p)

    vmem_limit = _vmem_limit_bytes()
    tm, td = _choose_tiles(B, D_p, H_p, vmem_limit)
    B_p = _round_up(B, tm)
    num_m = B_p // tm
    num_d = D_p // td

    # pad batch/feature dims; matmul input in bf16 (f32 accumulate in-kernel)
    x_p = jnp.zeros((B_p, D_p), jnp.bfloat16).at[:B, :D].set(
        x_flat.astype(jnp.bfloat16))

    out = pl.pallas_call(
        _fused_kernel,
        out_shape=jax.ShapeDtypeStruct((n_heads, B_p, D_p), jnp.float32),
        grid_spec=pltpu.PrefetchScalarGridSpec(
            num_scalar_prefetch=0,
            grid=(num_m, n_heads, num_d),
            in_specs=[
                pl.BlockSpec((tm, D_p), lambda m, h, d: (m, 0)),        # x tile
                pl.BlockSpec((D_p, H_p), lambda m, h, d: (0, 0)),       # enc W
                pl.BlockSpec((1, H_p), lambda m, h, d: (0, 0)),         # enc b
                pl.BlockSpec((1, H_p, td), lambda m, h, d: (h, 0, d)),  # dec W tile
                pl.BlockSpec((1, 1, td), lambda m, h, d: (h, 0, d)),    # dec b tile
            ],
            out_specs=pl.BlockSpec((1, tm, td), lambda m, h, d: (h, m, d)),
            scratch_shapes=[pltpu.VMEM((tm, H_p), jnp.bfloat16)],       # h
        ),
        compiler_params=pltpu.CompilerParams(
            dimension_semantics=("parallel", "arbitrary", "arbitrary"),
            vmem_limit_bytes=vmem_limit,
        ),
        cost_estimate=pl.CostEstimate(
            flops=2 * B_p * D_p * H_p + 2 * B_p * H_p * n_heads * D_p,
            transcendentals=B_p * H_p,
            bytes_accessed=(2 * B_p * D_p + 2 * D_p * H_p + 4 * H_p
                            + num_m * n_heads * (2 * H_p * D_p + 4 * D_p)
                            + 4 * n_heads * B_p * D_p),
        ),
    )(x_p, we_p, be_p, wd_p, bd_p)

    # un-pad; output is already head-major -> just reshape to (n_heads, B, S, V)
    out = out[:, :B, :D]
    return out.reshape((n_heads,) + orig_shape)


def init_params(key, input_dim, hidden_dim, n_heads):
    """Deterministic nn.Linear-style init: U(-1/sqrt(fan_in), 1/sqrt(fan_in))."""
    k = jax.random.split(key, 4)
    enc_bound = 1.0 / (input_dim ** 0.5)
    dec_bound = 1.0 / (hidden_dim ** 0.5)
    w_enc = jax.random.uniform(k[0], (input_dim, hidden_dim), jnp.float32,
                               -enc_bound, enc_bound)
    b_enc = jax.random.uniform(k[1], (hidden_dim,), jnp.float32,
                               -enc_bound, enc_bound)
    w_dec = jax.random.uniform(k[2], (n_heads, hidden_dim, input_dim), jnp.float32,
                               -dec_bound, dec_bound)
    b_dec = jax.random.uniform(k[3], (n_heads, input_dim), jnp.float32,
                               -dec_bound, dec_bound)
    return w_enc, b_enc, w_dec, b_dec


if __name__ == "__main__":
    key = jax.random.PRNGKey(0)
    kx, kp = jax.random.split(key)

    # small shapes consistent with the module: (B, S, V) tree encoding
    B, S, V = 2, 8, 16            # input_dim = S*V = 128
    input_dim = S * V
    hidden_dim = 32
    n_heads = 2

    x = jax.random.normal(kx, (B, S, V), dtype=jnp.float32)
    w_enc, b_enc, w_dec, b_dec = init_params(kp, input_dim, hidden_dim, n_heads)
    we_p, be_p, wd_p, bd_p = pack_params(w_enc, b_enc, w_dec, b_dec)

    y = dense_autoencoder_forward(x, we_p, be_p, wd_p, bd_p, n_heads=n_heads)
    y = jax.block_until_ready(y)
    assert y.shape == (n_heads, B, S, V)

    # reference in plain JAX using the same bf16-input / f32-accumulate matmul
    # contract the kernel uses (dropout = identity in eval mode)
    x_flat = x.reshape(B, -1)
    h_ref = jnp.tanh(
        jnp.dot(x_flat.astype(jnp.bfloat16), w_enc.astype(jnp.bfloat16),
                preferred_element_type=jnp.float32) + b_enc)
    h_b = h_ref.astype(jnp.bfloat16)
    heads = []
    for n in range(n_heads):
        yn = jnp.dot(h_b, w_dec[n].astype(jnp.bfloat16),
                     preferred_element_type=jnp.float32) + b_dec[n]
        heads.append(jnp.where(yn > 0, yn, jnp.float32(0.01) * yn))
    y_ref = jnp.stack(heads).reshape(n_heads, B, S, V)

    max_err = float(jnp.max(jnp.abs(y - y_ref)))
    assert jnp.allclose(y, y_ref, atol=2e-3, rtol=2e-2), max_err

    print("KERNEL_OK")
</pallas_src>

<mosaic_0001>
module attributes {stable_mosaic.version = 11 : i64} {
  func.func @_fused_kernel(%arg0: i32, %arg1: i32, %arg2: i32, %arg3: memref<8x128xbf16, #tpu.memory_space<vmem>>, %arg4: memref<128x128xbf16, #tpu.memory_space<vmem>>, %arg5: memref<1x128xf32, #tpu.memory_space<vmem>>, %arg6: memref<1x128x128xbf16, #tpu.memory_space<vmem>>, %arg7: memref<1x1x128xf32, #tpu.memory_space<vmem>>, %arg8: memref<1x8x128xf32, #tpu.memory_space<vmem>>, %arg9: memref<8x128xbf16, #tpu.memory_space<vmem>>) attributes {dimension_semantics = [#tpu.dimension_semantics<parallel>, #tpu.dimension_semantics<arbitrary>, #tpu.dimension_semantics<arbitrary>], iteration_bounds = array<i64: 1, 2, 1>, scalar_prefetch = 0 : i64, scratch_operands = 1 : i64, tpu.core_type = #tpu.core_type<tc>, window_params = [{transform_indices = @transform_0, window_bounds = array<i64: 8, 128>}, {pipeline_mode = #tpu.pipeline_mode<synchronous>, transform_indices = @transform_1, window_bounds = array<i64: 128, 128>}, {pipeline_mode = #tpu.pipeline_mode<synchronous>, transform_indices = @transform_2, window_bounds = array<i64: 1, 128>}, {transform_indices = @transform_3, window_bounds = array<i64: 1, 128, 128>}, {transform_indices = @transform_4, window_bounds = array<i64: 1, 1, 128>}, {transform_indices = @transform_5, window_bounds = array<i64: 1, 8, 128>}]} {
    %c0_i32 = arith.constant 0 : i32
    %0 = arith.cmpi eq, %arg1, %c0_i32 : i32
    %c0_i32_0 = arith.constant 0 : i32
    %1 = arith.cmpi eq, %arg2, %c0_i32_0 : i32
    %2 = arith.andi %0, %1 : i1
    %3 = arith.extui %2 : i1 to i32
    %c0_i32_1 = arith.constant 0 : i32
    %4 = arith.cmpi ne, %3, %c0_i32_1 : i32
    scf.if %4 {
      %c0_14 = arith.constant 0 : index
      %c0_15 = arith.constant 0 : index
      %20 = vector.load %arg3[%c0_14, %c0_15] : memref<8x128xbf16, #tpu.memory_space<vmem>>, vector<8x128xbf16>
      %c0_16 = arith.constant 0 : index
      %c0_17 = arith.constant 0 : index
      %21 = vector.load %arg4[%c0_16, %c0_17] : memref<128x128xbf16, #tpu.memory_space<vmem>>, vector<128x128xbf16>
      %cst_18 = arith.constant dense<0.000000e+00> : vector<8x128xf32>
      %22 = tpu.matmul %20, %21, %cst_18 {dimension_numbers = #tpu.dot_dimension_numbers<[1], [0], [0], [1], [0, 0, 1, 1], [], []>} : vector<8x128xbf16>, vector<128x128xbf16>, vector<8x128xf32> -> vector<8x128xf32>
      %c0_19 = arith.constant 0 : index
      %c0_20 = arith.constant 0 : index
      %23 = vector.load %arg5[%c0_19, %c0_20] : memref<1x128xf32, #tpu.memory_space<vmem>>, vector<1x128xf32>
      %24 = vector.broadcast %23 : vector<1x128xf32> to vector<8x128xf32>
      %25 = arith.addf %22, %24 : vector<8x128xf32>
      %26 = math.tanh %25 : vector<8x128xf32>
      %27 = arith.truncf %26 : vector<8x128xf32> to vector<8x128xbf16>
      %c0_21 = arith.constant 0 : index
      %c0_22 = arith.constant 0 : index
      %28 = vector.load %arg9[%c0_21, %c0_22] : memref<8x128xbf16, #tpu.memory_space<vmem>>, vector<8x128xbf16>
      tpu.vector_store %arg9[%c0_21, %c0_22], %27 {strides = array<i32>} : memref<8x128xbf16, #tpu.memory_space<vmem>>, vector<8x128xbf16>,
    } else {
    }
    %c0 = arith.constant 0 : index
    %c0_2 = arith.constant 0 : index
    %5 = vector.load %arg9[%c0, %c0_2] : memref<8x128xbf16, #tpu.memory_space<vmem>>, vector<8x128xbf16>
    %c0_3 = arith.constant 0 : index
    %c0_4 = arith.constant 0 : index
    %c0_5 = arith.constant 0 : index
    %6 = vector.load %arg6[%c0_3, %c0_4, %c0_5] : memref<1x128x128xbf16, #tpu.memory_space<vmem>>, vector<1x128x128xbf16>
    %7 = vector.shape_cast %6 : vector<1x128x128xbf16> to vector<128x128xbf16>
    %cst = arith.constant dense<0.000000e+00> : vector<8x128xf32>
    %8 = tpu.matmul %5, %7, %cst {dimension_numbers = #tpu.dot_dimension_numbers<[1], [0], [0], [1], [0, 0, 1, 1], [], []>} : vector<8x128xbf16>, vector<128x128xbf16>, vector<8x128xf32> -> vector<8x128xf32>
    %c0_6 = arith.constant 0 : index
    %c0_7 = arith.constant 0 : index
    %c0_8 = arith.constant 0 : index
    %9 = vector.load %arg7[%c0_6, %c0_7, %c0_8] : memref<1x1x128xf32, #tpu.memory_space<vmem>>, vector<1x1x128xf32>
    %10 = vector.shape_cast %9 : vector<1x1x128xf32> to vector<1x128xf32>
    %11 = vector.broadcast %10 : vector<1x128xf32> to vector<8x128xf32>
    %12 = arith.addf %8, %11 : vector<8x128xf32>
    %cst_9 = arith.constant 0.000000e+00 : f32
    %13 = vector.broadcast %cst_9 : f32 to vector<8x128xf32>
    %14 = arith.cmpf ogt, %12, %13 : vector<8x128xf32>
    %cst_10 = arith.constant 0.00999999977 : f32
    %15 = vector.broadcast %cst_10 : f32 to vector<8x128xf32>
    %16 = arith.mulf %15, %12 : vector<8x128xf32>
    %17 = arith.select %14, %12, %16 : vector<8x128xi1>, vector<8x128xf32>
    %18 = vector.shape_cast %17 : vector<8x128xf32> to vector<1x8x128xf32>
    %c0_11 = arith.constant 0 : index
    %c0_12 = arith.constant 0 : index
    %c0_13 = arith.constant 0 : index
    %19 = vector.load %arg8[%c0_11, %c0_12, %c0_13] : memref<1x8x128xf32, #tpu.memory_space<vmem>>, vector<1x8x128xf32>
    tpu.vector_store %arg8[%c0_11, %c0_12, %c0_13], %18 {strides = array<i32>} : memref<1x8x128xf32, #tpu.memory_space<vmem>>, vector<1x8x128xf32>,
    return
  }
  func.func @transform_0(%arg0: i32, %arg1: i32, %arg2: i32) -> (i32, i32) {
    %c0_i32 = arith.constant 0 : i32
    %c0_i32_0 = arith.constant 0 : i32
    return %arg0, %c0_i32 : i32, i32
  }
  func.func @transform_1(%arg0: i32, %arg1: i32, %arg2: i32) -> (i32, i32) {
    %c0_i32 = arith.constant 0 : i32
    %c0_i32_0 = arith.constant 0 : i32
    %c0_i32_1 = arith.constant 0 : i32
    return %c0_i32, %c0_i32_0 : i32, i32
  }
  func.func @transform_2(%arg0: i32, %arg1: i32, %arg2: i32) -> (i32, i32) {
    %c0_i32 = arith.constant 0 : i32
    %c0_i32_0 = arith.constant 0 : i32
    %c0_i32_1 = arith.constant 0 : i32
    return %c0_i32, %c0_i32_0 : i32, i32
  }
  func.func @transform_3(%arg0: i32, %arg1: i32, %arg2: i32) -> (i32, i32, i32) {
    %c0_i32 = arith.constant 0 : i32
    %c0_i32_0 = arith.constant 0 : i32
    return %arg1, %c0_i32, %arg2 : i32, i32, i32
  }
  func.func @transform_4(%arg0: i32, %arg1: i32, %arg2: i32) -> (i32, i32, i32) {
    %c0_i32 = arith.constant 0 : i32
    %c0_i32_0 = arith.constant 0 : i32
    return %arg1, %c0_i32, %arg2 : i32, i32, i32
  }
  func.func @transform_5(%arg0: i32, %arg1: i32, %arg2: i32) -> (i32, i32, i32) {
    %c0_i32 = arith.constant 0 : i32
    return %arg1, %arg0, %arg2 : i32, i32, i32
  }
}

</mosaic_0001>

<llo_original>
// kernel: dense_autoencoder_forward.1
$region0: #{dense_autoencoder_forward.1}
  #allocation0 [shape = 'u32[]', space=smem, size = 0x4, offset = 0x4, fixed_abs, tag = 'smem constant byte address 0x4 - core index']
  #allocation1 [shape = 'u32[144,128]{1,0:T(1,128)}', space=vmem, size = 0x12000, scoped, tag = 'internal scratch']
  #allocation2 [shape = 'bf16[8,128]{1,0:T(8,128)(2,1)}', space=vmem, size = 0x800, scoped, tag = 'scratch operand']
  %s0 = inlined_call_operand.vmem [shape: bf16[8,128], index: 0, kind: input, shape index: {}]
  %s1 = inlined_call_operand.hbm [shape: bf16[128,128], index: 1, kind: input, shape index: {}]
  %s2 = inlined_call_operand.vmem [shape: f32[1,128], index: 2, kind: input, shape index: {}]
  %s3 = inlined_call_operand.hbm [shape: bf16[2,128,128], index: 3, kind: input, shape index: {}]
  %s4 = inlined_call_operand.vmem [shape: f32[2,1,128], index: 4, kind: input, shape index: {}]
  %s5 = inlined_call_operand.vmem [shape: f32[2,8,128], index: 5, kind: output, shape index: {}]
  %s6 = sld [smem:[#allocation0]]
  $region65: #{dense_autoencoder_forward.1} parent=0
    _
  %s8 = ssub.s32 1, %s6
  %s9 = scalar_select 0, %s8, %s6
  $region1: #{dense_autoencoder_forward.1} parent=0
    #allocation3 [shape = 'u8[32768]{0}', space=vmem, size = 0x8000, scoped, tag = 'input window, operand 1, single buffered']
    #allocation4 [shape = 's32[2]{0}', space=sflag, size = 0x8, scoped, tag = 'scoped memory for dense_autoencoder_forward.1']
    #allocation5 [shape = 'u8[65536]{0}', space=vmem, size = 0x10000, scoped, tag = 'input window, operand 3']
    #allocation6 [shape = 's32[2]{0}', space=sflag, size = 0x8, scoped, tag = 'scoped memory for dense_autoencoder_forward.1']
    %10 = vsyncpa [#allocation4], 0
    %11 = vsyncpa [#allocation6], 0
    %s12 = scalar_lea.sflag [#allocation6], 1
    %13 = vsyncpa %s12, 0
    loop: start=0, step=1, limit=4
    $region2: #{dense_autoencoder_forward.1} parent=1 // loop_pre_header
      _
    $region3: #{dense_autoencoder_forward.1} parent=1 // loop_header
      %s15 = sphi 0, %s19
      %p16 = scmp.ge.s32.totalorder %s15, 4
      %s22 = sphi 0, %s41
      %s23 = sphi 0, %s37
      %s24 = sphi 0, %s33
      %s25 = sphi 0, %s22
      %s26 = sphi 0, %s23
      %s27 = sphi 0, %s24
      %s28 = sphi 0, %s25
      %s29 = sphi 0, %s26
      %s30 = sphi 0, %s27
      %s44 = sphi 0, %s46
      %s47 = sphi 0, %s44
      %s48 = sphi 0, %s47
      %s64 = sphi 0, %s48
      %s68 = sphi 0, %s68
      %s70 = sphi 0, %s68
      %s71 = sphi 0, %s70
      %s85 = sphi 0, %s71
      %s89 = sphi 0, %s89
      %s91 = sphi 0, %s89
      %s92 = sphi 0, %s91
      %s106 = sphi 0, %s92
      %s114 = sphi 0, %s116
      %s117 = sphi 0, %s114
      %s118 = sphi 0, %s117
      %s134 = sphi 0, %s118
      %s142 = sphi 0, %s144
      %s145 = sphi 0, %s142
      %s146 = sphi 0, %s145
      %s162 = sphi 0, %s146
      %s172 = sphi 0, %s174
      %s175 = sphi 0, %s172
      %s176 = sphi 0, %s175
      %s192 = sphi 0, %s176
    $region4: #{dense_autoencoder_forward.1} parent=1 // loop_header_branch
      %18 = sbr.rel (%p16) target = $region8
    $region5: #{dense_autoencoder_forward.1} parent=1 // loop_body
      %s20 = ssub.s32 %s15, 1
      %s21 = ssub.s32 %s15, 2
      %s31 = sadd.s32 1, %s24
      %p32 = scmp.ge.s32.totalorder %s31, 1
      %s33 = scalar_select %p32, 0, %s31
      %s34 = sadd.s32 1, %s23
      %s35 = scalar_select %p32, %s34, %s23
      %p36 = scmp.ge.s32.totalorder %s35, 2
      %s37 = scalar_select %p36, 0, %s35
      %s38 = sadd.s32 1, %s22
      %s39 = scalar_select %p36, %s38, %s22
      %p40 = scmp.ge.s32.totalorder %s39, 1
      %s41 = scalar_select %p40, 0, %s39
      %s42 = ssub.s32 %s22, %s41
      %p43 = scmp.eq.s32.totalorder %s42, 0
      %s45 = sadd.s32 %s44, 1
      %s46 = scalar_select %p43, %s44, %s45
      %p49 = pneg %p43
      %p50 = scmp.eq.s32.totalorder %s15, 1
      %p51 = por %p49, %p50
      %p52 = scmp.ne.s32.totalorder %s44, %s47
      %p53 = scmp.eq.s32.totalorder %s15, 0
      %p54 = por %p52, %p53
      %p55 = scmp.ne.s32.totalorder %s44, %s47
      %p56 = scmp.eq.s32.totalorder %s20, 1
      %p57 = por %p55, %p56
      %p58 = scmp.ne.s32.totalorder %s47, %s48
      %p59 = scmp.eq.s32.totalorder %s20, 0
      %p60 = por %p58, %p59
      %p61 = scmp.ne.s32.totalorder %s47, %s48
      %p62 = scmp.eq.s32.totalorder %s21, 1
      %p63 = por %p61, %p62
      %p65 = scmp.ne.s32.totalorder %s48, %s64
      %p66 = scmp.eq.s32.totalorder %s21, 0
      %p67 = por %p65, %p66
      %s69 = sadd.s32 %s68, 1
      %p72 = scmp.eq.s32.totalorder %s15, 1
      %p73 = scmp.ne.s32.totalorder %s68, %s70
      %p74 = scmp.eq.s32.totalorder %s15, 0
      %p75 = por %p73, %p74
      %p76 = scmp.ne.s32.totalorder %s68, %s70
      %p77 = scmp.eq.s32.totalorder %s20, 1
      %p78 = por %p76, %p77
      %p79 = scmp.ne.s32.totalorder %s70, %s71
      %p80 = scmp.eq.s32.totalorder %s20, 0
      %p81 = por %p79, %p80
      %p82 = scmp.ne.s32.totalorder %s70, %s71
      %p83 = scmp.eq.s32.totalorder %s21, 1
      %p84 = por %p82, %p83
      %p86 = scmp.ne.s32.totalorder %s71, %s85
      %p87 = scmp.eq.s32.totalorder %s21, 0
      %p88 = por %p86, %p87
      %s90 = sadd.s32 %s89, 1
      %p93 = scmp.eq.s32.totalorder %s15, 1
      %p94 = scmp.ne.s32.totalorder %s89, %s91
      %p95 = scmp.eq.s32.totalorder %s15, 0
      %p96 = por %p94, %p95
      %p97 = scmp.ne.s32.totalorder %s89, %s91
      %p98 = scmp.eq.s32.totalorder %s20, 1
      %p99 = por %p97, %p98
      %p100 = scmp.ne.s32.totalorder %s91, %s92
      %p101 = scmp.eq.s32.totalorder %s20, 0
      %p102 = por %p100, %p101
      %p103 = scmp.ne.s32.totalorder %s91, %s92
      %p104 = scmp.eq.s32.totalorder %s21, 1
      %p105 = por %p103, %p104
      %p107 = scmp.ne.s32.totalorder %s92, %s106
      %p108 = scmp.eq.s32.totalorder %s21, 0
      %p109 = por %p107, %p108
      %s110 = ssub.s32 %s23, %s37
      %s111 = ssub.s32 %s24, %s33
      %s112 = sor.u32 %s110, %s111
      %p113 = scmp.eq.s32.totalorder %s112, 0
      %s115 = sadd.s32 %s114, 1
      %s116 = scalar_select %p113, %s114, %s115
      %p119 = pneg %p113
      %p120 = scmp.eq.s32.totalorder %s15, 1
      %p121 = por %p119, %p120
      %p122 = scmp.ne.s32.totalorder %s114, %s117
      %p123 = scmp.eq.s32.totalorder %s15, 0
      %p124 = por %p122, %p123
      %p125 = scmp.ne.s32.totalorder %s114, %s117
      %p126 = scmp.eq.s32.totalorder %s20, 1
      %p127 = por %p125, %p126
      %p128 = scmp.ne.s32.totalorder %s117, %s118
      %p129 = scmp.eq.s32.totalorder %s20, 0
      %p130 = por %p128, %p129
      %p131 = scmp.ne.s32.totalorder %s117, %s118
      %p132 = scmp.eq.s32.totalorder %s21, 1
      %p133 = por %p131, %p132
      %p135 = scmp.ne.s32.totalorder %s118, %s134
      %p136 = scmp.eq.s32.totalorder %s21, 0
      %p137 = por %p135, %p136
      %s138 = ssub.s32 %s23, %s37
      %s139 = ssub.s32 %s24, %s33
      %s140 = sor.u32 %s138, %s139
      %p141 = scmp.eq.s32.totalorder %s140, 0
      %s143 = sadd.s32 %s142, 1
      %s144 = scalar_select %p141, %s142, %s143
      %p147 = pneg %p141
      %p148 = scmp.eq.s32.totalorder %s15, 1
      %p149 = por %p147, %p148
      %p150 = scmp.ne.s32.totalorder %s142, %s145
      %p151 = scmp.eq.s32.totalorder %s15, 0
      %p152 = por %p150, %p151
      %p153 = scmp.ne.s32.totalorder %s142, %s145
      %p154 = scmp.eq.s32.totalorder %s20, 1
      %p155 = por %p153, %p154
      %p156 = scmp.ne.s32.totalorder %s145, %s146
      %p157 = scmp.eq.s32.totalorder %s20, 0
      %p158 = por %p156, %p157
      %p159 = scmp.ne.s32.totalorder %s145, %s146
      %p160 = scmp.eq.s32.totalorder %s21, 1
      %p161 = por %p159, %p160
      %p163 = scmp.ne.s32.totalorder %s146, %s162
      %p164 = scmp.eq.s32.totalorder %s21, 0
      %p165 = por %p163, %p164
      %s166 = ssub.s32 %s23, %s37
      %s167 = ssub.s32 %s22, %s41
      %s168 = sor.u32 %s166, %s167
      %s169 = ssub.s32 %s24, %s33
      %s170 = sor.u32 %s168, %s169
      %p171 = scmp.eq.s32.totalorder %s170, 0
      %s173 = sadd.s32 %s172, 1
      %s174 = scalar_select %p171, %s172, %s173
      %p177 = pneg %p171
      %p178 = scmp.eq.s32.totalorder %s15, 1
      %p179 = por %p177, %p178
      %p180 = scmp.ne.s32.totalorder %s172, %s175
      %p181 = scmp.eq.s32.totalorder %s15, 0
      %p182 = por %p180, %p181
      %p183 = scmp.ne.s32.totalorder %s172, %s175
      %p184 = scmp.eq.s32.totalorder %s20, 1
      %p185 = por %p183, %p184
      %p186 = scmp.ne.s32.totalorder %s175, %s176
      %p187 = scmp.eq.s32.totalorder %s20, 0
      %p188 = por %p186, %p187
      %p189 = scmp.ne.s32.totalorder %s175, %s176
      %p190 = scmp.eq.s32.totalorder %s21, 1
      %p191 = por %p189, %p190
      %p193 = scmp.ne.s32.totalorder %s176, %s192
      %p194 = scmp.eq.s32.totalorder %s21, 0
      %p195 = por %p193, %p194
      %p196 = scmp.le.s32.totalorder 1, %s15
      %p197 = scmp.lt.s32.totalorder %s15, 3
      %p198 = pnand %p196, %p197
      %p199 = pneg %p198
      // Predicated region
      $region9: #{dense_autoencoder_forward.1} parent=5 // pred_check
        _
      $region10: #{dense_autoencoder_forward.1} parent=5 // pred_check_branch
        %201 = sbr.rel (%p198) target = $region12
      $region11: #{dense_autoencoder_forward.1} parent=5 // pred_region
        %s202 = ssub.s32 %s15, 1
        // Predicated region
        $region13: #{dense_autoencoder_forward.1} parent=11 // pred_check
          %p203 = pneg %p60
        $region14: #{dense_autoencoder_forward.1} parent=11 // pred_check_branch
          %205 = sbr.rel (%p203) target = $region16
        $region15: #{dense_autoencoder_forward.1} parent=11 // pred_region
          %p206 = scmp.lt.s32.totalorder %s25, 0
          %s207 = scalar_select %p206, %s25, 0
          %s208 = smul.addr %s207, 4
          %s209 = scalar_lea.vmem %s0, %s208
        $region16: #{dense_autoencoder_forward.1} parent=11 // pred_fallthru
          _
        // Predicated region
        $region17: #{dense_autoencoder_forward.1} parent=11 // pred_check
          %p210 = pneg %p81
        $region18: #{dense_autoencoder_forward.1} parent=11 // pred_check_branch
          %212 = sbr.rel (%p210) target = $region20
        $region19: #{dense_autoencoder_forward.1} parent=11 // pred_region
          %s214 = ssub.s32 1024, 1024
          %215 = vsyncadd [#allocation4], %s214
          %s216 = sshll.u32 [#allocation3], 4
          %s217 = int_to_ptr.vmem [resolvable:$true] %s216
          %222 = dma.hbm_to_vmem [thread:$0]  %s1, 1024, %s217, [#allocation4], 64, 64, 4
        $region20: #{dense_autoencoder_forward.1} parent=11 // pred_fallthru
          _
        // Predicated region
        $region21: #{dense_autoencoder_forward.1} parent=11 // pred_check
          %p223 = pneg %p102
        $region22: #{dense_autoencoder_forward.1} parent=11 // pred_check_branch
          %225 = sbr.rel (%p223) target = $region24
        $region23: #{dense_autoencoder_forward.1} parent=11 // pred_region
          _
        $region24: #{dense_autoencoder_forward.1} parent=11 // pred_fallthru
          _
      $region12: #{dense_autoencoder_forward.1} parent=5 // pred_fallthru
        _
      %p226 = scmp.lt.s32.totalorder %s15, 2
      // Predicated region
      $region25: #{dense_autoencoder_forward.1} parent=5 // pred_check
        %p227 = pneg %p226
      $region26: #{dense_autoencoder_forward.1} parent=5 // pred_check_branch
        %229 = sbr.rel (%p227) target = $region28
      $region27: #{dense_autoencoder_forward.1} parent=5 // pred_region
        // Predicated region
        $region29: #{dense_autoencoder_forward.1} parent=27 // pred_check
          %p230 = pneg %p124
        $region30: #{dense_autoencoder_forward.1} parent=27 // pred_check_branch
          %232 = sbr.rel (%p230) target = $region32
        $region31: #{dense_autoencoder_forward.1} parent=27 // pred_region
          %s233 = sand.u32 %s114, 1
          %s234 = scalar_lea.sflag [#allocation6], %s233
          %s235 = sand.u32 %s114, 1
          %s236 = smul.addr %s235, 64
          %s237 = scalar_lea.vmem [#allocation5], %s236
          %s239 = ssub.s32 1024, 1024
          %240 = vsyncadd %s234, %s239
          %s241 = smul.addr %s23, 16
          %s242 = sadd.s32 %s24, %s241
          %s243 = smul.addr %s242, 64
          %s244 = scalar_lea.hbm %s3, %s243
          %s245 = sshll.u32 %s237, 4
          %s246 = int_to_ptr.vmem [resolvable:$true] %s245
          %251 = dma.hbm_to_vmem [thread:$0]  %s244, 1024, %s246, %s234, 64, 64, 4
        $region32: #{dense_autoencoder_forward.1} parent=27 // pred_fallthru
          _
        // Predicated region
        $region33: #{dense_autoencoder_forward.1} parent=27 // pred_check
          %p252 = pneg %p152
        $region34: #{dense_autoencoder_forward.1} parent=27 // pred_check_branch
          %254 = sbr.rel (%p252) target = $region36
        $region35: #{dense_autoencoder_forward.1} parent=27 // pred_region
          %p255 = scmp.lt.s32.totalorder %s23, 1
          %s256 = scalar_select %p255, %s23, 1
          %p257 = scmp.lt.s32.totalorder %s24, 0
          %s258 = scalar_select %p257, %s24, 0
          %s259 = sadd.s32 %s258, %s256
          %s260 = scalar_lea.vmem %s4, %s259
        $region36: #{dense_autoencoder_forward.1} parent=27 // pred_fallthru
          _
      $region28: #{dense_autoencoder_forward.1} parent=5 // pred_fallthru
        _
      %p261 = scmp.le.s32.totalorder 1, %s15
      %p262 = scmp.lt.s32.totalorder %s15, 3
      %p263 = pnand %p261, %p262
      %p264 = pneg %p263
      // Predicated region
      $region37: #{dense_autoencoder_forward.1} parent=5 // pred_check
        _
      $region38: #{dense_autoencoder_forward.1} parent=5 // pred_check_branch
        %266 = sbr.rel (%p263) target = $region40
      $region39: #{dense_autoencoder_forward.1} parent=5 // pred_region
        %s267 = ssub.s32 %s15, 1
        // Predicated region
        $region41: #{dense_autoencoder_forward.1} parent=39 // pred_check
          %p268 = pneg %p81
        $region42: #{dense_autoencoder_forward.1} parent=39 // pred_check_branch
          %270 = sbr.rel (%p268) target = $region44
        $region43: #{dense_autoencoder_forward.1} parent=39 // pred_region
          %271 = dma.done [#allocation4], 1024
        $region44: #{dense_autoencoder_forward.1} parent=39 // pred_fallthru
          _
        %s272 = sand.u32 %s117, 1
        %s273 = scalar_lea.sflag [#allocation6], %s272
        %s274 = sand.u32 %s117, 1
        %s275 = smul.addr %s274, 64
        %s276 = scalar_lea.vmem [#allocation5], %s275
        // Predicated region
        $region45: #{dense_autoencoder_forward.1} parent=39 // pred_check
          %p277 = pneg %p130
        $region46: #{dense_autoencoder_forward.1} parent=39 // pred_check_branch
          %279 = sbr.rel (%p277) target = $region48
        $region47: #{dense_autoencoder_forward.1} parent=39 // pred_region
          %280 = dma.done %s273, 1024
        $region48: #{dense_autoencoder_forward.1} parent=39 // pred_fallthru
          _
        %p281 = scmp.lt.s32.totalorder %s25, 0
        %s282 = scalar_select %p281, %s25, 0
        %s283 = smul.addr %s282, 4
        %s284 = scalar_lea.vmem %s0, %s283
        %p285 = pneg %p60
        %p286 = pneg %p57
        %p287 = pneg %p81
        %p288 = pneg %p78
        %p289 = pneg %p102
        %p290 = pneg %p99
        %s291 = sand.u32 %s117, 1
        %s292 = scalar_lea.sflag [#allocation6], %s291
        %s293 = sand.u32 %s117, 1
        %s294 = smul.addr %s293, 64
        %s295 = scalar_lea.vmem [#allocation5], %s294
        %p296 = pneg %p130
        %p297 = pneg %p127
        %p298 = scmp.lt.s32.totalorder %s26, 1
        %s299 = scalar_select %p298, %s26, 1
        %p300 = scmp.lt.s32.totalorder %s27, 0
        %s301 = scalar_select %p300, %s27, 0
        %s302 = sadd.s32 %s301, %s299
        %s303 = scalar_lea.vmem %s4, %s302
        %p304 = pneg %p158
        %p305 = pneg %p155
        %p306 = pneg %p188
        %p307 = pneg %p185
        %p308 = scmp.lt.s32.totalorder %s26, 1
        %s309 = scalar_select %p308, %s26, 1
        %p310 = scmp.lt.s32.totalorder %s25, 0
        %s311 = scalar_select %p310, %s25, 0
        %p312 = scmp.lt.s32.totalorder %s27, 0
        %s313 = scalar_select %p312, %s27, 0
        %s314 = sadd.s32 %s313, %s311
        %s315 = sadd.s32 %s314, %s309
        %s316 = smul.addr %s315, 8
        %s317 = scalar_lea.vmem %s5, %s316
        %p318 = scmp.lt.s32.totalorder %s25, 0
        %s319 = scalar_select %p318, %s25, 0
        %s320 = smul.addr %s319, 4
        %s321 = scalar_lea.vmem %s0, %s320
        %p322 = scmp.lt.s32.totalorder %s26, 1
        %s323 = scalar_select %p322, %s26, 1
        %p324 = scmp.lt.s32.totalorder %s27, 0
        %s325 = scalar_select %p324, %s27, 0
        %s326 = sadd.s32 %s325, %s323
        %s327 = scalar_lea.vmem %s4, %s326
        %p328 = scmp.lt.s32.totalorder %s26, 1
        %s329 = scalar_select %p328, %s26, 1
        %p330 = scmp.lt.s32.totalorder %s25, 0
        %s331 = scalar_select %p330, %s25, 0
        %p332 = scmp.lt.s32.totalorder %s27, 0
        %s333 = scalar_select %p332, %s27, 0
        %s334 = sadd.s32 %s333, %s331
        %s335 = sadd.s32 %s334, %s329
        %s336 = smul.addr %s335, 8
        %s337 = scalar_lea.vmem %s5, %s336
        %p339 = scmp.eq.s32.totalorder %s26, 0
        %p340 = scmp.eq.s32.totalorder %s27, 0
        %p341 = pnand %p339, %p340
        %p342 = pneg %p341
        // Predicated region
        $region49: #{dense_autoencoder_forward.1} parent=39 // pred_check
          _
        $region50: #{dense_autoencoder_forward.1} parent=39 // pred_check_branch
          %344 = sbr.rel (%p341) target = $region52
        $region51: #{dense_autoencoder_forward.1} parent=39 // pred_region
          %v345 = vld [vmem:[%s321] sm:$0xf]
          %v346 = vld [vmem:[#allocation3] sm:$0xf]
          %v347 = vld [vmem:[#allocation3 + $0x4] sm:$0xf]
          %v348 = vld [vmem:[#allocation3 + $0x8] sm:$0xf]
          %v349 = vld [vmem:[#allocation3 + $0xc] sm:$0xf]
          %v350 = vld [vmem:[#allocation3 + $0x10] sm:$0xf]
          %v351 = vld [vmem:[#allocation3 + $0x14] sm:$0xf]
          %v352 = vld [vmem:[#allocation3 + $0x18] sm:$0xf]
          %v353 = vld [vmem:[#allocation3 + $0x1c] sm:$0xf]
          %v354 = vld [vmem:[#allocation3 + $0x20] sm:$0xf]
          %v355 = vld [vmem:[#allocation3 + $0x24] sm:$0xf]
          %v356 = vld [vmem:[#allocation3 + $0x28] sm:$0xf]
          %v357 = vld [vmem:[#allocation3 + $0x2c] sm:$0xf]
          %v358 = vld [vmem:[#allocation3 + $0x30] sm:$0xf]
          %v359 = vld [vmem:[#allocation3 + $0x34] sm:$0xf]
          %v360 = vld [vmem:[#allocation3 + $0x38] sm:$0xf]
          %v361 = vld [vmem:[#allocation3 + $0x3c] sm:$0xf]
          %v362 = vld [vmem:[%s2] sm:$0x1]
          %v364 = vlaneseq
          %v365 = vshrl.u32 %v364, 7
          %v366 = vsub.s32 0, %v365
          %v367 = vrot.slane %v362, %v366
          %v385 = vunpack.c.l.b16 %v346
          %v386 = vunpack.c.l.b16 %v347
          %v387 = vunpack.c.l.b16 %v348
          %v388 = vunpack.c.l.b16 %v349
          %v389 = vunpack.c.l.b16 %v350
          %v390 = vunpack.c.l.b16 %v351
          %v391 = vunpack.c.l.b16 %v352
          %v392 = vunpack.c.l.b16 %v353
          %v393 = vunpack.c.l.b16 %v354
          %v394 = vunpack.c.l.b16 %v355
          %v395 = vunpack.c.l.b16 %v356
          %v396 = vunpack.c.l.b16 %v357
          %v397 = vunpack.c.l.b16 %v358
          %v398 = vunpack.c.l.b16 %v359
          %v399 = vunpack.c.l.b16 %v360
          %v400 = vunpack.c.l.b16 %v361
          %v401 = vpack.c.b16 %v386, %v385
          %v402 = vpack.c.b16 %v388, %v387
          %v403 = vpack.c.b16 %v390, %v389
          %v404 = vpack.c.b16 %v392, %v391
          %v405 = vpack.c.b16 %v394, %v393
          %v406 = vpack.c.b16 %v396, %v395
          %v407 = vpack.c.b16 %v398, %v397
          %v408 = vpack.c.b16 %v400, %v399
          %417 = vmatprep.subr.bf16.mxu0 0
          %418 = vmatpush1.bf16.msra.mxu0 %v408
          %419 = vmatprep.subr.bf16.mxu0 0
          %420 = vmatpush1.bf16.msra.mxu0 %v407
          %421 = vmatprep.subr.bf16.mxu0 0
          %422 = vmatpush1.bf16.msra.mxu0 %v406
          %423 = vmatprep.subr.bf16.mxu0 0
          %424 = vmatpush1.bf16.msra.mxu0 %v405
          %425 = vmatprep.subr.bf16.mxu0 0
          %426 = vmatpush1.bf16.msra.mxu0 %v404
          %427 = vmatprep.subr.bf16.mxu0 0
          %428 = vmatpush1.bf16.msra.mxu0 %v403
          %429 = vmatprep.subr.bf16.mxu0 0
          %430 = vmatpush1.bf16.msra.mxu0 %v402
          %431 = vmatprep.subr.bf16.mxu0 0
          %432 = vmatpush1.bf16.msra.mxu0 %v401
          %433 = vmatprep.subr.bf16.mxu0 0
          %434 = vmatpush2.bf16.msra.mxu0 0
          %435 = vmatprep.subr.bf16.mxu0 0
          %436 = vmatpush2.bf16.msra.mxu0 0
          %437 = vmatprep.subr.bf16.mxu0 0
          %438 = vmatpush2.bf16.msra.mxu0 0
          %439 = vmatprep.subr.bf16.mxu0 0
          %440 = vmatpush2.bf16.msra.mxu0 0
          %441 = vmatprep.subr.bf16.mxu0 0
          %442 = vmatpush2.bf16.msra.mxu0 0
          %443 = vmatprep.subr.bf16.mxu0 0
          %444 = vmatpush2.bf16.msra.mxu0 0
          %445 = vmatprep.subr.bf16.mxu0 0
          %446 = vmatpush2.bf16.msra.mxu0 0
          %447 = vmatprep.subr.bf16.mxu0 0
          %448 = vmatpush2.bf16.msra.mxu0 0
          %449 = vmatprep.mubr.bf16.mxu0 0
          %450 = vmatmul.mubr.bf16.gmra.mxu0 %v345
          %v451 = vpop.f32.mrf.mxu0
          %v452 = vadd.f32 %v367, %v451
          %v453 = vpop.f32.mrf.mxu0
          %v454 = vpop.f32.mrf.mxu0
          %v455 = vpop.f32.mrf.mxu0
          %456 = vdwg.mxu0
          %v457 = vtanh.pop %v452
          %v458 = vpack.c.bf16 %v457, %v457
          %459 = vst [vmem:[#allocation2] sm:$0xf] %v458
        $region52: #{dense_autoencoder_forward.1} parent=39 // pred_fallthru
          _
        %v460 = vld [vmem:[#allocation2] sm:$0xf]
        %v461 = vld [vmem:[%s276] sm:$0xf]
        %v462 = vld [vmem:[%s276 + $0x4] sm:$0xf]
        %v463 = vld [vmem:[%s276 + $0x8] sm:$0xf]
        %v464 = vld [vmem:[%s276 + $0xc] sm:$0xf]
        %v465 = vld [vmem:[%s276 + $0x10] sm:$0xf]
        %v466 = vld [vmem:[%s276 + $0x14] sm:$0xf]
        %v467 = vld [vmem:[%s276 + $0x18] sm:$0xf]
        %v468 = vld [vmem:[%s276 + $0x1c] sm:$0xf]
        %v469 = vld [vmem:[%s276 + $0x20] sm:$0xf]
        %v470 = vld [vmem:[%s276 + $0x24] sm:$0xf]
        %v471 = vld [vmem:[%s276 + $0x28] sm:$0xf]
        %v472 = vld [vmem:[%s276 + $0x2c] sm:$0xf]
        %v473 = vld [vmem:[%s276 + $0x30] sm:$0xf]
        %v474 = vld [vmem:[%s276 + $0x34] sm:$0xf]
        %v475 = vld [vmem:[%s276 + $0x38] sm:$0xf]
        %v476 = vld [vmem:[%s276 + $0x3c] sm:$0xf]
        %v477 = vld [vmem:[%s327] sm:$0x1]
        %v479 = vlaneseq
        %v480 = vshrl.u32 %v479, 7
        %v481 = vsub.s32 0, %v480
        %v482 = vrot.slane %v477, %v481
        %v500 = vunpack.c.l.b16 %v461
        %v501 = vunpack.c.l.b16 %v462
        %v502 = vunpack.c.l.b16 %v463
        %v503 = vunpack.c.l.b16 %v464
        %v504 = vunpack.c.l.b16 %v465
        %v505 = vunpack.c.l.b16 %v466
        %v506 = vunpack.c.l.b16 %v467
        %v507 = vunpack.c.l.b16 %v468
        %v508 = vunpack.c.l.b16 %v469
        %v509 = vunpack.c.l.b16 %v470
        %v510 = vunpack.c.l.b16 %v471
        %v511 = vunpack.c.l.b16 %v472
        %v512 = vunpack.c.l.b16 %v473
        %v513 = vunpack.c.l.b16 %v474
        %v514 = vunpack.c.l.b16 %v475
        %v515 = vunpack.c.l.b16 %v476
        %v516 = vpack.c.b16 %v501, %v500
        %v517 = vpack.c.b16 %v503, %v502
        %v518 = vpack.c.b16 %v505, %v504
        %v519 = vpack.c.b16 %v507, %v506
        %v520 = vpack.c.b16 %v509, %v508
        %v521 = vpack.c.b16 %v511, %v510
        %v522 = vpack.c.b16 %v513, %v512
        %v523 = vpack.c.b16 %v515, %v514
        %532 = vmatprep.subr.bf16.mxu0 0
        %533 = vmatpush1.bf16.msra.mxu0 %v523
        %534 = vmatprep.subr.bf16.mxu0 0
        %535 = vmatpush1.bf16.msra.mxu0 %v522
        %536 = vmatprep.subr.bf16.mxu0 0
        %537 = vmatpush1.bf16.msra.mxu0 %v521
        %538 = vmatprep.subr.bf16.mxu0 0
        %539 = vmatpush1.bf16.msra.mxu0 %v520
        %540 = vmatprep.subr.bf16.mxu0 0
        %541 = vmatpush1.bf16.msra.mxu0 %v519
        %542 = vmatprep.subr.bf16.mxu0 0
        %543 = vmatpush1.bf16.msra.mxu0 %v518
        %544 = vmatprep.subr.bf16.mxu0 0
        %545 = vmatpush1.bf16.msra.mxu0 %v517
        %546 = vmatprep.subr.bf16.mxu0 0
        %547 = vmatpush1.bf16.msra.mxu0 %v516
        %548 = vmatprep.subr.bf16.mxu0 0
        %549 = vmatpush2.bf16.msra.mxu0 0
        %550 = vmatprep.subr.bf16.mxu0 0
        %551 = vmatpush2.bf16.msra.mxu0 0
        %552 = vmatprep.subr.bf16.mxu0 0
        %553 = vmatpush2.bf16.msra.mxu0 0
        %554 = vmatprep.subr.bf16.mxu0 0
        %555 = vmatpush2.bf16.msra.mxu0 0
        %556 = vmatprep.subr.bf16.mxu0 0
        %557 = vmatpush2.bf16.msra.mxu0 0
        %558 = vmatprep.subr.bf16.mxu0 0
        %559 = vmatpush2.bf16.msra.mxu0 0
        %560 = vmatprep.subr.bf16.mxu0 0
        %561 = vmatpush2.bf16.msra.mxu0 0
        %562 = vmatprep.subr.bf16.mxu0 0
        %563 = vmatpush2.bf16.msra.mxu0 0
        %564 = vmatprep.mubr.bf16.mxu0 0
        %565 = vmatmul.mubr.bf16.gmra.mxu0 %v460
        %v566 = vpop.f32.mrf.mxu0
        %v567 = vadd.f32 %v482, %v566
        %v568 = vpop.f32.mrf.mxu0
        %v569 = vpop.f32.mrf.mxu0
        %v570 = vpop.f32.mrf.mxu0
        %571 = vdwg.mxu0
        %vm572 = vcmp.gt.f32.partialorder %v567, 0.0
        %v573 = vmul.f32 %v567, 0.01
        %v574 = vsel %vm572, %v567, %v573
        %575 = vst [vmem:[%s337] sm:$0xff] %v574
        %p576 = scmp.lt.s32.totalorder %s26, 1
        %s577 = scalar_select %p576, %s26, 1
        %p578 = scmp.lt.s32.totalorder %s25, 0
        %s579 = scalar_select %p578, %s25, 0
        %p580 = scmp.lt.s32.totalorder %s27, 0
        %s581 = scalar_select %p580, %s27, 0
        %s582 = sadd.s32 %s581, %s579
        %s583 = sadd.s32 %s582, %s577
        %s584 = smul.addr %s583, 8
        %s585 = scalar_lea.vmem %s5, %s584
        // Predicated region
        $region53: #{dense_autoencoder_forward.1} parent=39 // pred_check
          %p586 = pneg %p185
        $region54: #{dense_autoencoder_forward.1} parent=39 // pred_check_branch
          %588 = sbr.rel (%p586) target = $region56
        $region55: #{dense_autoencoder_forward.1} parent=39 // pred_region
          _
        $region56: #{dense_autoencoder_forward.1} parent=39 // pred_fallthru
          _
      $region40: #{dense_autoencoder_forward.1} parent=5 // pred_fallthru
        _
      %p589 = scmp.le.s32.totalorder 2, %s15
      // Predicated region
      $region57: #{dense_autoencoder_forward.1} parent=5 // pred_check
        %p590 = pneg %p589
      $region58: #{dense_autoencoder_forward.1} parent=5 // pred_check_branch
        %592 = sbr.rel (%p590) target = $region60
      $region59: #{dense_autoencoder_forward.1} parent=5 // pred_region
        %s593 = ssub.s32 %s15, 2
        // Predicated region
        $region61: #{dense_autoencoder_forward.1} parent=59 // pred_check
          %p594 = pneg %p191
        $region62: #{dense_autoencoder_forward.1} parent=59 // pred_check_branch
          %596 = sbr.rel (%p594) target = $region64
        $region63: #{dense_autoencoder_forward.1} parent=59 // pred_region
          %p597 = scmp.lt.s32.totalorder %s29, 1
          %s598 = scalar_select %p597, %s29, 1
          %p599 = scmp.lt.s32.totalorder %s28, 0
          %s600 = scalar_select %p599, %s28, 0
          %p601 = scmp.lt.s32.totalorder %s30, 0
          %s602 = scalar_select %p601, %s30, 0
          %s603 = sadd.s32 %s602, %s600
          %s604 = sadd.s32 %s603, %s598
          %s605 = smul.addr %s604, 8
          %s606 = scalar_lea.vmem %s5, %s605
        $region64: #{dense_autoencoder_forward.1} parent=59 // pred_fallthru
          _
      $region60: #{dense_autoencoder_forward.1} parent=5 // pred_fallthru
        _
    $region6: #{dense_autoencoder_forward.1} parent=1 // loop_footer
      %s19 = sadd.s32 1, %s15
    $region7: #{dense_autoencoder_forward.1} parent=1 // loop_footer_branch
      %14 = sbr.rel target = $region3
    $region8: #{dense_autoencoder_forward.1} parent=1 // loop_exit
      _
    %607 = vsyncpa [#allocation4], 1
    %s608 = scalar_lea.sflag [#allocation4], 1
    %609 = vsyncpa %s608, 1
    %610 = vsyncpa [#allocation6], 1
    %s611 = scalar_lea.sflag [#allocation6], 1
    %612 = vsyncpa %s611, 1

</llo_original>
